<compile_context>
chip_gen: v5e
topology: v5e:2x2
jax: 0.10.0
libtpu: 0.0.40
codegen_flags: <defaults>
</compile_context>

<pallas_src>
import jax
import jax.numpy as jnp
import numpy as np
from jax.experimental import pallas as pl
from jax.experimental.pallas import tpu as pltpu

_HP = jax.lax.Precision.HIGHEST   # used ONLY in the one-time weights fold


# ----------------------------------------------------------------------------------
# Kernels
# ----------------------------------------------------------------------------------
def _silu_store(y, o_ref):
    """Numerically stable SiLU epilogue in f32: y * sigmoid(y), sigmoid via tanh (EUP)."""
    o_ref[...] = (y * (0.5 * jnp.tanh(0.5 * y) + 0.5)).astype(o_ref.dtype)


def _fused_kernel(x_ref, t_ref, b_ref, o_ref):
    """y = silu(x @ T + bias); whole folded operator resident in VMEM.

    x_ref: (TB, K) bf16   t_ref: (K, Np) bf16   b_ref: (1, Np) f32   o_ref: (TB, Np) f32
    Single bf16 MXU pass with f32 accumulation (no precision=HIGHEST here).
    """
    y = jnp.dot(x_ref[...], t_ref[...], preferred_element_type=jnp.float32)
    _silu_store(y + b_ref[...], o_ref)


def _ktiled_kernel(x_ref, t_ref, b_ref, o_ref, acc_ref):
    """Fallback when T exceeds the VMEM budget: stream T over a K grid axis.

    Grid = (batch_tiles, k_steps); acc_ref: (TB, Np) f32 scratch accumulator.
    """
    k = pl.program_id(1)

    @pl.when(k == 0)
    def _():
        acc_ref[...] = jnp.zeros_like(acc_ref)

    acc_ref[...] += jnp.dot(x_ref[...], t_ref[...], preferred_element_type=jnp.float32)

    @pl.when(k == pl.num_programs(1) - 1)
    def _():
        _silu_store(acc_ref[...] + b_ref[...], o_ref)


# ----------------------------------------------------------------------------------
# Planning helpers
# ----------------------------------------------------------------------------------
def _round_up(v, m):
    return -(-v // m) * m


def _vmem_capacity_bytes():
    """Per-core VMEM capacity; conservative v7x default (64 MiB) if the query fails."""
    try:
        cap = getattr(pltpu.get_tpu_info(), "vmem_capacity_bytes", None)
        if cap:
            return int(cap)
    except Exception:
        pass
    return 64 * 1024 * 1024


def _plan_tiles(batch, k_dim, n_pad, budget_bytes):
    """Pick (mode, batch_tile, k_tile, k_steps) for a VMEM byte budget.

    Byte model: x/T are bf16 (2 B), bias/out/accumulator are f32 (4 B).  Streamed
    operands are double-buffered by the pipeline; the grid-invariant folded operator
    is single-buffered (pl.Buffered(1)).
    """
    BPE_X = BPE_T = 2
    BPE_B = BPE_O = BPE_ACC = 4

    # ---- fused path: whole folded operator resident in VMEM -----------------------
    const_bytes = k_dim * n_pad * BPE_T + n_pad * BPE_B
    per_row = 2 * (k_dim * BPE_X + n_pad * BPE_O)          # double-buffered x + out rows
    if const_bytes + 8 * per_row <= budget_bytes:
        tb = int(min(batch, (budget_bytes - const_bytes) // per_row, 1024))
        # Keep M large.  Only split a single-step grid in two (for v7x's second
        # TensorCore) when each half still feeds the MXU >= 256 rows; on single-TC
        # v5e/v6e the extra step is ~0.35us -- noise at that size.
        if tb >= batch and batch >= 512:
            tb = -(-batch // 2)
        if tb < batch:
            tb = max(8, (tb // 8) * 8)                     # sublane-aligned tile
        return "fused", min(tb, batch), k_dim, 1

    # ---- K-tiled path: stream T in (tk, n_pad) blocks, accumulate in f32 scratch --
    tb = min(batch, 256)
    if tb < batch:
        tb = max(8, (tb // 8) * 8)
    while True:
        fixed = n_pad * BPE_B + tb * n_pad * (BPE_ACC + 2 * BPE_O)
        per_k = 2 * (n_pad * BPE_T + tb * BPE_X)           # double-buffered T / x blocks
        tk = ((budget_bytes - fixed) // per_k) // 128 * 128 if budget_bytes > fixed else 0
        if tk >= 128:
            break
        if tb <= 8:
            # TODO(synk): add N tiling for outputs too wide even at tk=128, tb=8.
            raise ValueError(
                "SpectralConv1d: n_grid*out_dim too wide for the VMEM budget even "
                "with K tiling; N tiling is not implemented.")
        tb = max(8, (tb // 2 // 8) * 8)
    tk = int(min(tk, _round_up(k_dim, 128)))
    k_steps = -(-k_dim // tk)
    return "ktiled", tb, tk, k_steps


# ----------------------------------------------------------------------------------
# Weights fold: Linear + rfft(ortho) + truncated complex mode mixing + irfft(ortho)
# ----------------------------------------------------------------------------------
def _build_folded_operator(lin_w, lin_b, fourier_weight, n_grid, modes):
    """Fold the whole (affine) layer into T: (n*in, n*out) f32 and bias: (1, n*out) f32."""
    in_dim, out_dim = lin_w.shape
    n = n_grid

    # Truncated real-DFT bases in float64 numpy, cast to f32 once (weights-only work).
    k = np.arange(modes)[:, None].astype(np.float64)
    p = np.arange(n)[None, :].astype(np.float64)
    ang = 2.0 * np.pi * k * p / n
    scale = 1.0 / np.sqrt(n)
    cf = (np.cos(ang) * scale).astype(np.float32)               # (modes, n): xr =  cf @ x
    sf = (np.sin(ang) * scale).astype(np.float32)               # (modes, n): xi = -sf @ x
    herm = np.where((k == 0) | ((n % 2 == 0) & (k == n // 2)), 1.0, 2.0)
    cinv = (np.cos(ang) * scale * herm).T.astype(np.float32)    # (n, modes)
    sinv = (np.sin(ang) * scale * herm).T.astype(np.float32)    # (n, modes)

    wr = fourier_weight[..., 0]    # (in_dim, out_dim, modes)
    wi = fourier_weight[..., 1]

    # spec[b,m,o] = sum_{p,i} x[b,p,i] * Tspec[p,i,m,o]
    t_spec = (jnp.einsum('kp,nk,iok->pino', cf, cinv, wr, precision=_HP)
              - jnp.einsum('kp,nk,iok->pino', cf, sinv, wi, precision=_HP)
              + jnp.einsum('kp,nk,iok->pino', sf, cinv, wi, precision=_HP)
              + jnp.einsum('kp,nk,iok->pino', sf, sinv, wr, precision=_HP))
    # Residual nn.Linear folded in on the diagonal of the grid axis.
    t_res = jnp.einsum('pn,io->pino', jnp.eye(n, dtype=jnp.float32), lin_w, precision=_HP)

    t_full = (t_spec + t_res).reshape(n * in_dim, n * out_dim).astype(jnp.float32)
    bias = jnp.tile(lin_b.astype(jnp.float32), n).reshape(1, n * out_dim)
    return t_full, bias


# ----------------------------------------------------------------------------------
# Forward wrapper
# ----------------------------------------------------------------------------------
def spectral_conv1d(x, lin_w, lin_b, fourier_weight, modes, *, vmem_budget_bytes=None):
    """Pallas forward of SpectralConv1d (eval mode).  x: (B, n_grid, in_dim) -> (B, n_grid, out_dim)."""
    B, n_grid, in_dim = x.shape
    out_dim = lin_w.shape[1]
    if modes > n_grid // 2 + 1:
        raise ValueError("modes must be <= n_grid // 2 + 1")

    k_dim = n_grid * in_dim
    n_dim = n_grid * out_dim
    n_pad = _round_up(n_dim, 128)          # lane-dense output slab (unmasked stores)

    t_full, bias = _build_folded_operator(lin_w, lin_b, fourier_weight, n_grid, modes)
    if n_pad != n_dim:
        t_full = jnp.pad(t_full, ((0, 0), (0, n_pad - n_dim)))   # weights-only pad
        bias = jnp.pad(bias, ((0, 0), (0, n_pad - n_dim)))
    bias = bias.astype(jnp.float32)

    cap = _vmem_capacity_bytes()
    budget = int(cap * 0.60) if vmem_budget_bytes is None else int(vmem_budget_bytes)
    vmem_limit = int(cap * 0.75)

    mode, tb, tk, k_steps = _plan_tiles(B, k_dim, n_pad, budget)

    # bf16 storage for the streamed operands (halves HBM traffic / T's footprint);
    # accumulation and epilogue stay f32 via preferred_element_type.
    x_in = jnp.asarray(x, jnp.bfloat16).reshape(B, k_dim)        # free reshape
    t_in = t_full.astype(jnp.bfloat16)

    nb = -(-B // tb)
    b_pad = nb * tb
    if b_pad != B:
        x_in = jnp.pad(x_in, ((0, b_pad - B), (0, 0)))

    if mode == "ktiled":
        k_tot = tk * k_steps
        if k_tot != k_dim:
            x_in = jnp.pad(x_in, ((0, 0), (0, k_tot - k_dim)))
            t_in = jnp.pad(t_in, ((0, k_tot - k_dim), (0, 0)))
    else:
        k_tot = k_dim

    def _launch(single_buffered_consts):
        const_kw = {}
        if single_buffered_consts:
            # Grid-invariant operands: one DMA, one resident copy.
            const_kw = dict(pipeline_mode=pl.Buffered(1))

        if mode == "fused":
            grid = (nb,)
            kern = _fused_kernel
            in_specs = [
                pl.BlockSpec((tb, k_dim), lambda b: (b, 0)),
                pl.BlockSpec((k_dim, n_pad), lambda b: (0, 0), **const_kw),
                pl.BlockSpec((1, n_pad), lambda b: (0, 0), **const_kw),
            ]
            out_spec = pl.BlockSpec((tb, n_pad), lambda b: (b, 0))
            scratch = []
            semantics = ("parallel",)
        else:
            grid = (nb, k_steps)
            kern = _ktiled_kernel
            in_specs = [
                pl.BlockSpec((tb, tk), lambda b, k: (b, k)),
                pl.BlockSpec((tk, n_pad), lambda b, k: (k, 0)),
                pl.BlockSpec((1, n_pad), lambda b, k: (0, 0), **const_kw),
            ]
            out_spec = pl.BlockSpec((tb, n_pad), lambda b, k: (b, 0))
            scratch = [pltpu.VMEM((tb, n_pad), jnp.float32)]
            semantics = ("parallel", "arbitrary")

        cost = pl.CostEstimate(
            flops=int(2 * b_pad * k_tot * n_pad),
            transcendentals=int(b_pad * n_pad),
            bytes_accessed=int(x_in.size * 2 + t_in.size * 2
                               + bias.size * 4 + b_pad * n_pad * 4))

        return pl.pallas_call(
            kern,
            out_shape=jax.ShapeDtypeStruct((b_pad, n_pad), jnp.float32),
            grid_spec=pltpu.PrefetchScalarGridSpec(
                num_scalar_prefetch=0,
                grid=grid,
                in_specs=in_specs,
                out_specs=out_spec,
                scratch_shapes=scratch),
            compiler_params=pltpu.CompilerParams(
                dimension_semantics=semantics,
                vmem_limit_bytes=vmem_limit),
            cost_estimate=cost,
        )(x_in, t_in, bias)

    try:
        out_flat = _launch(single_buffered_consts=True)
    except Exception:
        # pl.Buffered(1) not supported on this JAX version/backend: fall back to the
        # default double-buffered pipeline (costs one extra resident copy of T).
        out_flat = _launch(single_buffered_consts=False)

    return out_flat[:B, :n_dim].reshape(B, n_grid, out_dim)


# ----------------------------------------------------------------------------------
# Pure-JAX reference (mirrors the PyTorch forward in eval mode) and tests
# ----------------------------------------------------------------------------------
def reference(x, lin_w, lin_b, fourier_weight, modes):
    n = x.shape[1]
    res = jnp.einsum('bni,io->bno', x, lin_w, precision=_HP) + lin_b
    xp = jnp.transpose(x, (0, 2, 1))
    x_ft = jnp.fft.rfft(xp, n=n, norm='ortho')
    ar = jnp.real(x_ft)[..., :modes]
    ai = jnp.imag(x_ft)[..., :modes]
    wr, wi = fourier_weight[..., 0], fourier_weight[..., 1]
    o_r = (jnp.einsum('bix,iox->box', ar, wr, precision=_HP)
           - jnp.einsum('bix,iox->box', ai, wi, precision=_HP))
    o_i = (jnp.einsum('bix,iox->box', ai, wr, precision=_HP)
           + jnp.einsum('bix,iox->box', ar, wi, precision=_HP))
    out_ft = o_r + 1j * o_i
    pad = n // 2 + 1 - modes
    out_ft = jnp.pad(out_ft, ((0, 0), (0, 0), (0, pad)))
    xs = jnp.fft.irfft(out_ft, n=n, norm='ortho')
    xs = jnp.transpose(xs, (0, 2, 1))
    return jax.nn.silu(xs + res)


def _run_case(key, B, n_grid, in_dim, out_dim, modes, vmem_budget_bytes=None):
    kx, kw, kb, kf = jax.random.split(key, 4)

    x = jax.random.normal(kx, (B, n_grid, in_dim), jnp.float32)

    # nn.Linear(in_dim, out_dim): uniform(-1/sqrt(in_dim), 1/sqrt(in_dim))
    bound = 1.0 / np.sqrt(in_dim)
    lin_w = jax.random.uniform(kw, (in_dim, out_dim), jnp.float32, -bound, bound)
    lin_b = jax.random.uniform(kb, (out_dim,), jnp.float32, -bound, bound)

    # fourier_weight: (in_dim, out_dim, modes, 2), xavier_normal with gain 1/(in*out)
    gain = 1.0 / (in_dim * out_dim)
    fan_in, fan_out = out_dim * modes * 2, in_dim * modes * 2
    std = gain * np.sqrt(2.0 / (fan_in + fan_out))
    fw = std * jax.random.normal(kf, (in_dim, out_dim, modes, 2), jnp.float32)

    out = jax.block_until_ready(
        spectral_conv1d(x, lin_w, lin_b, fw, modes, vmem_budget_bytes=vmem_budget_bytes))
    ref = jax.block_until_ready(reference(x, lin_w, lin_b, fw, modes))
    assert out.shape == (B, n_grid, out_dim)
    # Tolerance reflects the intentional bf16 storage of x / the folded operator
    # (and MXU bf16 operand rounding on real hardware); accumulation/epilogue are f32.
    if not np.allclose(np.asarray(out), np.asarray(ref), atol=2e-2, rtol=2e-2):
        err = np.max(np.abs(np.asarray(out) - np.asarray(ref)))
        raise AssertionError(f"Pallas kernel mismatch vs JAX reference (max abs err {err})")


if __name__ == "__main__":
    root = jax.random.PRNGKey(0)
    k1, k2, k3 = jax.random.split(root, 3)
    # Small case (module layout (-1, n_grid, in_features)); n_grid*out_dim = 96
    # exercises the lane-padding of the output slab (96 -> 128).
    _run_case(k1, B=2, n_grid=16, in_dim=4, out_dim=6, modes=5)
    # Medium case: fused path, one grid step, batch tile = full batch (no splitting).
    _run_case(k2, B=32, n_grid=64, in_dim=8, out_dim=8, modes=16)
    # Same shapes with an artificially small VMEM budget to exercise the K-tiled
    # fallback (streamed operator, f32 accumulator, 'arbitrary' K axis).
    _run_case(k3, B=32, n_grid=64, in_dim=8, out_dim=8, modes=16,
              vmem_budget_bytes=400 * 1024)
    print("KERNEL_OK")
</pallas_src>

<mosaic_0001>
module attributes {stable_mosaic.version = 11 : i64} {
  func.func @_fused_kernel(%arg0: i32, %arg1: memref<2x64xbf16, #tpu.memory_space<vmem>>, %arg2: memref<64x128xbf16, #tpu.memory_space<vmem>>, %arg3: memref<1x128xf32, #tpu.memory_space<vmem>>, %arg4: memref<2x128xf32, #tpu.memory_space<vmem>>) attributes {dimension_semantics = [#tpu.dimension_semantics<parallel>], iteration_bounds = array<i64: 1>, scalar_prefetch = 0 : i64, scratch_operands = 0 : i64, tpu.core_type = #tpu.core_type<tc>, window_params = [{transform_indices = @transform_0, window_bounds = array<i64: 2, 64>}, {pipeline_mode = #tpu.pipeline_mode<synchronous>, transform_indices = @transform_1, window_bounds = array<i64: 64, 128>}, {pipeline_mode = #tpu.pipeline_mode<synchronous>, transform_indices = @transform_2, window_bounds = array<i64: 1, 128>}, {transform_indices = @transform_3, window_bounds = array<i64: 2, 128>}]} {
    %c0 = arith.constant 0 : index
    %c0_0 = arith.constant 0 : index
    %0 = vector.load %arg1[%c0, %c0_0] : memref<2x64xbf16, #tpu.memory_space<vmem>>, vector<2x64xbf16>
    %c0_1 = arith.constant 0 : index
    %c0_2 = arith.constant 0 : index
    %1 = vector.load %arg2[%c0_1, %c0_2] : memref<64x128xbf16, #tpu.memory_space<vmem>>, vector<64x128xbf16>
    %cst = arith.constant dense<0.000000e+00> : vector<2x128xf32>
    %2 = tpu.matmul %0, %1, %cst {dimension_numbers = #tpu.dot_dimension_numbers<[1], [0], [0], [1], [0, 0, 1, 1], [], []>} : vector<2x64xbf16>, vector<64x128xbf16>, vector<2x128xf32> -> vector<2x128xf32>
    %c0_3 = arith.constant 0 : index
    %c0_4 = arith.constant 0 : index
    %3 = vector.load %arg3[%c0_3, %c0_4] : memref<1x128xf32, #tpu.memory_space<vmem>>, vector<1x128xf32>
    %4 = vector.broadcast %3 : vector<1x128xf32> to vector<2x128xf32>
    %5 = arith.addf %2, %4 : vector<2x128xf32>
    %cst_5 = arith.constant 5.000000e-01 : f32
    %6 = vector.broadcast %cst_5 : f32 to vector<2x128xf32>
    %7 = arith.mulf %6, %5 : vector<2x128xf32>
    %8 = math.tanh %7 : vector<2x128xf32>
    %cst_6 = arith.constant 5.000000e-01 : f32
    %9 = vector.broadcast %cst_6 : f32 to vector<2x128xf32>
    %10 = arith.mulf %9, %8 : vector<2x128xf32>
    %cst_7 = arith.constant 5.000000e-01 : f32
    %11 = vector.broadcast %cst_7 : f32 to vector<2x128xf32>
    %12 = arith.addf %10, %11 : vector<2x128xf32>
    %13 = arith.mulf %5, %12 : vector<2x128xf32>
    %c0_8 = arith.constant 0 : index
    %c0_9 = arith.constant 0 : index
    %14 = vector.load %arg4[%c0_8, %c0_9] : memref<2x128xf32, #tpu.memory_space<vmem>>, vector<2x128xf32>
    tpu.vector_store %arg4[%c0_8, %c0_9], %13 {strides = array<i32>} : memref<2x128xf32, #tpu.memory_space<vmem>>, vector<2x128xf32>,
    return
  }
  func.func @transform_0(%arg0: i32) -> (i32, i32) {
    %c0_i32 = arith.constant 0 : i32
    %c0_i32_0 = arith.constant 0 : i32
    return %arg0, %c0_i32 : i32, i32
  }
  func.func @transform_1(%arg0: i32) -> (i32, i32) {
    %c0_i32 = arith.constant 0 : i32
    %c0_i32_0 = arith.constant 0 : i32
    %c0_i32_1 = arith.constant 0 : i32
    return %c0_i32, %c0_i32_0 : i32, i32
  }
  func.func @transform_2(%arg0: i32) -> (i32, i32) {
    %c0_i32 = arith.constant 0 : i32
    %c0_i32_0 = arith.constant 0 : i32
    %c0_i32_1 = arith.constant 0 : i32
    return %c0_i32, %c0_i32_0 : i32, i32
  }
  func.func @transform_3(%arg0: i32) -> (i32, i32) {
    %c0_i32 = arith.constant 0 : i32
    %c0_i32_0 = arith.constant 0 : i32
    return %arg0, %c0_i32 : i32, i32
  }
}

module attributes {stable_mosaic.version = 11 : i64} {
  func.func @_fused_kernel(%arg0: i32, %arg1: memref<2x64xbf16, #tpu.memory_space<vmem>>, %arg2: memref<64x128xbf16, #tpu.memory_space<vmem>>, %arg3: memref<1x128xf32, #tpu.memory_space<vmem>>, %arg4: memref<2x128xf32, #tpu.memory_space<vmem>>) attributes {dimension_semantics = [#tpu.dimension_semantics<parallel>], iteration_bounds = array<i64: 1>, scalar_prefetch = 0 : i64, scratch_operands = 0 : i64, tpu.core_type = #tpu.core_type<tc>, window_params = [{transform_indices = @transform_0, window_bounds = array<i64: 2, 64>}, {pipeline_mode = #tpu.pipeline_mode<synchronous>, transform_indices = @transform_1, window_bounds = array<i64: 64, 128>}, {pipeline_mode = #tpu.pipeline_mode<synchronous>, transform_indices = @transform_2, window_bounds = array<i64: 1, 128>}, {transform_indices = @transform_3, window_bounds = array<i64: 2, 128>}]} {
    %c0 = arith.constant 0 : index
    %c0_0 = arith.constant 0 : index
    %0 = vector.load %arg1[%c0, %c0_0] : memref<2x64xbf16, #tpu.memory_space<vmem>>, vector<2x64xbf16>
    %c0_1 = arith.constant 0 : index
    %c0_2 = arith.constant 0 : index
    %1 = vector.load %arg2[%c0_1, %c0_2] : memref<64x128xbf16, #tpu.memory_space<vmem>>, vector<64x128xbf16>
    %cst = arith.constant dense<0.000000e+00> : vector<2x128xf32>
    %2 = tpu.matmul %0, %1, %cst {dimension_numbers = #tpu.dot_dimension_numbers<[1], [0], [0], [1], [0, 0, 1, 1], [], []>} : vector<2x64xbf16>, vector<64x128xbf16>, vector<2x128xf32> -> vector<2x128xf32>
    %c0_3 = arith.constant 0 : index
    %c0_4 = arith.constant 0 : index
    %3 = vector.load %arg3[%c0_3, %c0_4] : memref<1x128xf32, #tpu.memory_space<vmem>>, vector<1x128xf32>
    %4 = vector.broadcast %3 : vector<1x128xf32> to vector<2x128xf32>
    %5 = arith.addf %2, %4 : vector<2x128xf32>
    %cst_5 = arith.constant 5.000000e-01 : f32
    %6 = vector.broadcast %cst_5 : f32 to vector<2x128xf32>
    %7 = arith.mulf %6, %5 : vector<2x128xf32>
    %8 = math.tanh %7 : vector<2x128xf32>
    %cst_6 = arith.constant 5.000000e-01 : f32
    %9 = vector.broadcast %cst_6 : f32 to vector<2x128xf32>
    %10 = arith.mulf %9, %8 : vector<2x128xf32>
    %cst_7 = arith.constant 5.000000e-01 : f32
    %11 = vector.broadcast %cst_7 : f32 to vector<2x128xf32>
    %12 = arith.addf %10, %11 : vector<2x128xf32>
    %13 = arith.mulf %5, %12 : vector<2x128xf32>
    %c0_8 = arith.constant 0 : index
    %c0_9 = arith.constant 0 : index
    %14 = vector.load %arg4[%c0_8, %c0_9] : memref<2x128xf32, #tpu.memory_space<vmem>>, vector<2x128xf32>
    tpu.vector_store %arg4[%c0_8, %c0_9], %13 {strides = array<i32>} : memref<2x128xf32, #tpu.memory_space<vmem>>, vector<2x128xf32>,
    return
  }
  func.func @transform_0(%arg0: i32) -> (i32, i32) {
    %c0_i32 = arith.constant 0 : i32
    %c0_i32_0 = arith.constant 0 : i32
    return %arg0, %c0_i32 : i32, i32
  }
  func.func @transform_1(%arg0: i32) -> (i32, i32) {
    %c0_i32 = arith.constant 0 : i32
    %c0_i32_0 = arith.constant 0 : i32
    %c0_i32_1 = arith.constant 0 : i32
    return %c0_i32, %c0_i32_0 : i32, i32
  }
  func.func @transform_2(%arg0: i32) -> (i32, i32) {
    %c0_i32 = arith.constant 0 : i32
    %c0_i32_0 = arith.constant 0 : i32
    %c0_i32_1 = arith.constant 0 : i32
    return %c0_i32, %c0_i32_0 : i32, i32
  }
  func.func @transform_3(%arg0: i32) -> (i32, i32) {
    %c0_i32 = arith.constant 0 : i32
    %c0_i32_0 = arith.constant 0 : i32
    return %arg0, %c0_i32 : i32, i32
  }
}

</mosaic_0001>

<llo_original>
// kernel: tpu_custom_call.1
$region0: #{tpu_custom_call.1}
  #allocation0 [shape = 'u32[]', space=smem, size = 0x4, offset = 0x4, fixed_abs, tag = 'smem constant byte address 0x4 - core index']
  #allocation1 [shape = 'u32[72,128]{1,0:T(1,128)}', space=vmem, size = 0x9000, scoped, tag = 'internal scratch']
  %s0 = inlined_call_operand.hbm [shape: bf16[2,64], index: 0, kind: input, shape index: {}]
  %s1 = inlined_call_operand.hbm [shape: bf16[64,128], index: 1, kind: input, shape index: {}]
  %s2 = inlined_call_operand.vmem [shape: f32[1,128], index: 2, kind: input, shape index: {}]
  %s3 = inlined_call_operand.hbm [shape: f32[2,128], index: 3, kind: output, shape index: {}]
  %s4 = sld [smem:[#allocation0]]
  $region30: #{tpu_custom_call.1} parent=0
    _
  %s6 = ssub.s32 1, %s4
  %s7 = scalar_select 0, %s6, %s4
  $region1: #{tpu_custom_call.1} parent=0
    #allocation2 [shape = 'u8[512]{0}', space=vmem, size = 0x400, scoped, tag = 'input window, operand 0, single buffered']
    #allocation3 [shape = 's32[1]{0}', space=sflag, size = 0x4, scoped, tag = 'scoped memory for tpu_custom_call.1']
    #allocation4 [shape = 's32[1]{0}', space=sflag, size = 0x4, scoped, tag = 'scoped memory for tpu_custom_call.1']
    #allocation5 [shape = 'u8[16384]{0}', space=vmem, size = 0x4000, scoped, tag = 'input window, operand 1, single buffered']
    #allocation6 [shape = 's32[1]{0}', space=sflag, size = 0x4, scoped, tag = 'scoped memory for tpu_custom_call.1']
    #allocation7 [shape = 'u8[1024]{0}', space=vmem, size = 0x400, scoped, tag = 'output window, operand 0, single buffered']
    %8 = vsyncpa [#allocation3], 0
    %9 = vsyncpa [#allocation6], 0
    %10 = vsyncpa [#allocation4], 0
    // Predicated region
    $region2: #{tpu_custom_call.1} parent=1 // pred_check
      _
    $region3: #{tpu_custom_call.1} parent=1 // pred_check_branch
      %12 = sbr.rel (0) target = $region5
    $region4: #{tpu_custom_call.1} parent=1 // pred_region
      %14 = vsyncadd [#allocation3], 0
      %s16 = sshll.u32 %s0, 4
      %s17 = int_to_ptr.hbm [resolvable:$true] %s16
      %s18 = sshll.u32 [#allocation2], 4
      %s19 = int_to_ptr.vmem [resolvable:$true] %s18
      %21 = dma.hbm_to_vmem [thread:$0]  %s17, 16, %s19, [#allocation3]
    $region5: #{tpu_custom_call.1} parent=1 // pred_fallthru
      _
    // Predicated region
    $region6: #{tpu_custom_call.1} parent=1 // pred_check
      _
    $region7: #{tpu_custom_call.1} parent=1 // pred_check_branch
      %23 = sbr.rel (0) target = $region9
    $region8: #{tpu_custom_call.1} parent=1 // pred_region
      %25 = vsyncadd [#allocation6], 0
      %s26 = sshll.u32 %s1, 4
      %s27 = int_to_ptr.hbm [resolvable:$true] %s26
      %s28 = sshll.u32 [#allocation5], 4
      %s29 = int_to_ptr.vmem [resolvable:$true] %s28
      %34 = dma.hbm_to_vmem [thread:$0]  %s27, 512, %s29, [#allocation6], 64, 64, 4
    $region9: #{tpu_custom_call.1} parent=1 // pred_fallthru
      _
    // Predicated region
    $region10: #{tpu_custom_call.1} parent=1 // pred_check
      _
    $region11: #{tpu_custom_call.1} parent=1 // pred_check_branch
      %36 = sbr.rel (0) target = $region13
    $region12: #{tpu_custom_call.1} parent=1 // pred_region
      _
    $region13: #{tpu_custom_call.1} parent=1 // pred_fallthru
      _
    // Predicated region
    $region14: #{tpu_custom_call.1} parent=1 // pred_check
      _
    $region15: #{tpu_custom_call.1} parent=1 // pred_check_branch
      %38 = sbr.rel (0) target = $region17
    $region16: #{tpu_custom_call.1} parent=1 // pred_region
      %40 = dma.done [#allocation3], 16
    $region17: #{tpu_custom_call.1} parent=1 // pred_fallthru
      _
    // Predicated region
    $region18: #{tpu_custom_call.1} parent=1 // pred_check
      _
    $region19: #{tpu_custom_call.1} parent=1 // pred_check_branch
      %42 = sbr.rel (0) target = $region21
    $region20: #{tpu_custom_call.1} parent=1 // pred_region
      %44 = dma.done [#allocation6], 512
    $region21: #{tpu_custom_call.1} parent=1 // pred_fallthru
      _
    %v46 = vld [vmem:[#allocation2] sm:$0x1]
    %v47 = vld [vmem:[#allocation5] sm:$0xf]
    %v48 = vld [vmem:[#allocation5 + $0x4] sm:$0xf]
    %v49 = vld [vmem:[#allocation5 + $0x8] sm:$0xf]
    %v50 = vld [vmem:[#allocation5 + $0xc] sm:$0xf]
    %v51 = vld [vmem:[#allocation5 + $0x10] sm:$0xf]
    %v52 = vld [vmem:[#allocation5 + $0x14] sm:$0xf]
    %v53 = vld [vmem:[#allocation5 + $0x18] sm:$0xf]
    %v54 = vld [vmem:[#allocation5 + $0x1c] sm:$0xf]
    %v55 = vld [vmem:[%s2] sm:$0x1]
    %v57 = vperm.slane %v55, 0
    %v67 = vunpack.c.l.b16 %v47
    %v68 = vunpack.c.l.b16 %v48
    %v69 = vunpack.c.l.b16 %v49
    %v70 = vunpack.c.l.b16 %v50
    %v71 = vunpack.c.l.b16 %v51
    %v72 = vunpack.c.l.b16 %v52
    %v73 = vunpack.c.l.b16 %v53
    %v74 = vunpack.c.l.b16 %v54
    %v75 = vpack.c.b16 %v68, %v67
    %v76 = vpack.c.b16 %v70, %v69
    %v77 = vpack.c.b16 %v72, %v71
    %v78 = vpack.c.b16 %v74, %v73
    %vm83 = vcmask 523264
    %v85 = vsel %vm83, %v46, 0
    %87 = vmatpush.bf16.msra.mxu0 0
    %88 = vmatpush.bf16.msra.mxu0 0
    %89 = vmatpush.bf16.msra.mxu0 0
    %90 = vmatpush.bf16.msra.mxu0 0
    %91 = vmatpush.bf16.msra.mxu0 %v78
    %92 = vmatpush.bf16.msra.mxu0 %v77
    %93 = vmatpush.bf16.msra.mxu0 %v76
    %94 = vmatpush.bf16.msra.mxu0 %v75
    %95 = vmatmul.bf16.gmra.mxu0 %v85
    %v96 = vpop.f32.mrf.mxu0
    %v97 = vadd.f32 %v57, %v96
    %v98 = vpop.f32.mrf.mxu0
    %99 = vdwg.mxu0
    %v100 = vmul.f32 %v97, 0.5
    %v101 = vtanh.pop %v100
    %v102 = vmul.f32 %v101, 0.5
    %v103 = vadd.f32 %v102, 0.5
    %v104 = vmul.f32 %v97, %v103
    %105 = vst [vmem:[#allocation7] sm:$0x3] %v104
    // Predicated region
    $region22: #{tpu_custom_call.1} parent=1 // pred_check
      _
    $region23: #{tpu_custom_call.1} parent=1 // pred_check_branch
      %107 = sbr.rel (0) target = $region25
    $region24: #{tpu_custom_call.1} parent=1 // pred_region
      %109 = vsyncadd [#allocation4], 0
      %s111 = sshll.u32 [#allocation7], 4
      %s112 = int_to_ptr.vmem [resolvable:$true] %s111
      %s113 = sshll.u32 %s3, 4
      %s114 = int_to_ptr.hbm [resolvable:$true] %s113
      %116 = dma.vmem_to_hbm [thread:$0]  %s112, 32, %s114, [#allocation4]
    $region25: #{tpu_custom_call.1} parent=1 // pred_fallthru
      _
    // Predicated region
    $region26: #{tpu_custom_call.1} parent=1 // pred_check
      _
    $region27: #{tpu_custom_call.1} parent=1 // pred_check_branch
      %118 = sbr.rel (0) target = $region29
    $region28: #{tpu_custom_call.1} parent=1 // pred_region
      %120 = dma.done [#allocation4], 32
    $region29: #{tpu_custom_call.1} parent=1 // pred_fallthru
      _
    %121 = vsyncpa [#allocation3], 1
    %122 = vsyncpa [#allocation6], 1
    %123 = vsyncpa [#allocation4], 1

// kernel: tpu_custom_call.1
$region0: #{tpu_custom_call.1}
  #allocation0 [shape = 'u32[]', space=smem, size = 0x4, offset = 0x4, fixed_abs, tag = 'smem constant byte address 0x4 - core index']
  #allocation1 [shape = 'u32[72,128]{1,0:T(1,128)}', space=vmem, size = 0x9000, scoped, tag = 'internal scratch']
  %s0 = inlined_call_operand.hbm [shape: bf16[2,64], index: 0, kind: input, shape index: {}]
  %s1 = inlined_call_operand.hbm [shape: bf16[64,128], index: 1, kind: input, shape index: {}]
  %s2 = inlined_call_operand.vmem [shape: f32[1,128], index: 2, kind: input, shape index: {}]
  %s3 = inlined_call_operand.hbm [shape: f32[2,128], index: 3, kind: output, shape index: {}]
  %s4 = sld [smem:[#allocation0]]
  $region30: #{tpu_custom_call.1} parent=0
    _
  %s6 = ssub.s32 1, %s4
  %s7 = scalar_select 0, %s6, %s4
  $region1: #{tpu_custom_call.1} parent=0
    #allocation2 [shape = 'u8[512]{0}', space=vmem, size = 0x400, scoped, tag = 'input window, operand 0, single buffered']
    #allocation3 [shape = 's32[1]{0}', space=sflag, size = 0x4, scoped, tag = 'scoped memory for tpu_custom_call.1']
    #allocation4 [shape = 's32[1]{0}', space=sflag, size = 0x4, scoped, tag = 'scoped memory for tpu_custom_call.1']
    #allocation5 [shape = 'u8[16384]{0}', space=vmem, size = 0x4000, scoped, tag = 'input window, operand 1, single buffered']
    #allocation6 [shape = 's32[1]{0}', space=sflag, size = 0x4, scoped, tag = 'scoped memory for tpu_custom_call.1']
    #allocation7 [shape = 'u8[1024]{0}', space=vmem, size = 0x400, scoped, tag = 'output window, operand 0, single buffered']
    %8 = vsyncpa [#allocation3], 0
    %9 = vsyncpa [#allocation6], 0
    %10 = vsyncpa [#allocation4], 0
    // Predicated region
    $region2: #{tpu_custom_call.1} parent=1 // pred_check
      _
    $region3: #{tpu_custom_call.1} parent=1 // pred_check_branch
      %12 = sbr.rel (0) target = $region5
    $region4: #{tpu_custom_call.1} parent=1 // pred_region
      %14 = vsyncadd [#allocation3], 0
      %s16 = sshll.u32 %s0, 4
      %s17 = int_to_ptr.hbm [resolvable:$true] %s16
      %s18 = sshll.u32 [#allocation2], 4
      %s19 = int_to_ptr.vmem [resolvable:$true] %s18
      %21 = dma.hbm_to_vmem [thread:$0]  %s17, 16, %s19, [#allocation3]
    $region5: #{tpu_custom_call.1} parent=1 // pred_fallthru
      _
    // Predicated region
    $region6: #{tpu_custom_call.1} parent=1 // pred_check
      _
    $region7: #{tpu_custom_call.1} parent=1 // pred_check_branch
      %23 = sbr.rel (0) target = $region9
    $region8: #{tpu_custom_call.1} parent=1 // pred_region
      %25 = vsyncadd [#allocation6], 0
      %s26 = sshll.u32 %s1, 4
      %s27 = int_to_ptr.hbm [resolvable:$true] %s26
      %s28 = sshll.u32 [#allocation5], 4
      %s29 = int_to_ptr.vmem [resolvable:$true] %s28
      %34 = dma.hbm_to_vmem [thread:$0]  %s27, 512, %s29, [#allocation6], 64, 64, 4
    $region9: #{tpu_custom_call.1} parent=1 // pred_fallthru
      _
    // Predicated region
    $region10: #{tpu_custom_call.1} parent=1 // pred_check
      _
    $region11: #{tpu_custom_call.1} parent=1 // pred_check_branch
      %36 = sbr.rel (0) target = $region13
    $region12: #{tpu_custom_call.1} parent=1 // pred_region
      _
    $region13: #{tpu_custom_call.1} parent=1 // pred_fallthru
      _
    // Predicated region
    $region14: #{tpu_custom_call.1} parent=1 // pred_check
      _
    $region15: #{tpu_custom_call.1} parent=1 // pred_check_branch
      %38 = sbr.rel (0) target = $region17
    $region16: #{tpu_custom_call.1} parent=1 // pred_region
      %40 = dma.done [#allocation3], 16
    $region17: #{tpu_custom_call.1} parent=1 // pred_fallthru
      _
    // Predicated region
    $region18: #{tpu_custom_call.1} parent=1 // pred_check
      _
    $region19: #{tpu_custom_call.1} parent=1 // pred_check_branch
      %42 = sbr.rel (0) target = $region21
    $region20: #{tpu_custom_call.1} parent=1 // pred_region
      %44 = dma.done [#allocation6], 512
    $region21: #{tpu_custom_call.1} parent=1 // pred_fallthru
      _
    %v46 = vld [vmem:[#allocation2] sm:$0x1]
    %v47 = vld [vmem:[#allocation5] sm:$0xf]
    %v48 = vld [vmem:[#allocation5 + $0x4] sm:$0xf]
    %v49 = vld [vmem:[#allocation5 + $0x8] sm:$0xf]
    %v50 = vld [vmem:[#allocation5 + $0xc] sm:$0xf]
    %v51 = vld [vmem:[#allocation5 + $0x10] sm:$0xf]
    %v52 = vld [vmem:[#allocation5 + $0x14] sm:$0xf]
    %v53 = vld [vmem:[#allocation5 + $0x18] sm:$0xf]
    %v54 = vld [vmem:[#allocation5 + $0x1c] sm:$0xf]
    %v55 = vld [vmem:[%s2] sm:$0x1]
    %v57 = vperm.slane %v55, 0
    %v67 = vunpack.c.l.b16 %v47
    %v68 = vunpack.c.l.b16 %v48
    %v69 = vunpack.c.l.b16 %v49
    %v70 = vunpack.c.l.b16 %v50
    %v71 = vunpack.c.l.b16 %v51
    %v72 = vunpack.c.l.b16 %v52
    %v73 = vunpack.c.l.b16 %v53
    %v74 = vunpack.c.l.b16 %v54
    %v75 = vpack.c.b16 %v68, %v67
    %v76 = vpack.c.b16 %v70, %v69
    %v77 = vpack.c.b16 %v72, %v71
    %v78 = vpack.c.b16 %v74, %v73
    %vm83 = vcmask 523264
    %v85 = vsel %vm83, %v46, 0
    %87 = vmatpush.bf16.msra.mxu0 0
    %88 = vmatpush.bf16.msra.mxu0 0
    %89 = vmatpush.bf16.msra.mxu0 0
    %90 = vmatpush.bf16.msra.mxu0 0
    %91 = vmatpush.bf16.msra.mxu0 %v78
    %92 = vmatpush.bf16.msra.mxu0 %v77
    %93 = vmatpush.bf16.msra.mxu0 %v76
    %94 = vmatpush.bf16.msra.mxu0 %v75
    %95 = vmatmul.bf16.gmra.mxu0 %v85
    %v96 = vpop.f32.mrf.mxu0
    %v97 = vadd.f32 %v57, %v96
    %v98 = vpop.f32.mrf.mxu0
    %99 = vdwg.mxu0
    %v100 = vmul.f32 %v97, 0.5
    %v101 = vtanh.pop %v100
    %v102 = vmul.f32 %v101, 0.5
    %v103 = vadd.f32 %v102, 0.5
    %v104 = vmul.f32 %v97, %v103
    %105 = vst [vmem:[#allocation7] sm:$0x3] %v104
    // Predicated region
    $region22: #{tpu_custom_call.1} parent=1 // pred_check
      _
    $region23: #{tpu_custom_call.1} parent=1 // pred_check_branch
      %107 = sbr.rel (0) target = $region25
    $region24: #{tpu_custom_call.1} parent=1 // pred_region
      %109 = vsyncadd [#allocation4], 0
      %s111 = sshll.u32 [#allocation7], 4
      %s112 = int_to_ptr.vmem [resolvable:$true] %s111
      %s113 = sshll.u32 %s3, 4
      %s114 = int_to_ptr.hbm [resolvable:$true] %s113
      %116 = dma.vmem_to_hbm [thread:$0]  %s112, 32, %s114, [#allocation4]
    $region25: #{tpu_custom_call.1} parent=1 // pred_fallthru
      _
    // Predicated region
    $region26: #{tpu_custom_call.1} parent=1 // pred_check
      _
    $region27: #{tpu_custom_call.1} parent=1 // pred_check_branch
      %118 = sbr.rel (0) target = $region29
    $region28: #{tpu_custom_call.1} parent=1 // pred_region
      %120 = dma.done [#allocation4], 32
    $region29: #{tpu_custom_call.1} parent=1 // pred_fallthru
      _
    %121 = vsyncpa [#allocation3], 1
    %122 = vsyncpa [#allocation6], 1
    %123 = vsyncpa [#allocation4], 1

</llo_original>
